<compile_context>
chip_gen: v5e
topology: v5e:2x2
jax: 0.10.0
libtpu: 0.0.40
codegen_flags: <defaults>
</compile_context>

<pallas_src>
import functools

import jax
import jax.numpy as jnp
from jax.experimental import pallas as pl
from jax.experimental.pallas import tpu as pltpu


_MAX_TB = 512  # cap on the batch tile


def _device_kind():
    try:
        return jax.devices()[0].device_kind.lower()
    except Exception:
        return ""


def _cores_per_chip():
    """2 TensorCores per chip on v4/v5p/v7x (megacore); 1 on v5e/v6e."""
    kind = _device_kind()
    if "v7" in kind or "v4" in kind or "v5p" in kind:
        return 2
    return 1


def _vmem_capacity_bytes():
    try:
        info = pltpu.get_tpu_info()
        for name in ("vmem_capacity_bytes", "vmem_size_bytes", "vmem_bytes"):
            v = getattr(info, name, None)
            if v:
                return int(v)
    except Exception:
        pass
    # Fallback: per-TC VMEM is 64 MiB on v7x, 128 MiB on v5e/v6e.
    return 64 * 1024 * 1024 if "v7" in _device_kind() else 128 * 1024 * 1024


def _vmem_budget():
    """Returns (bytes per input block, vmem_limit_bytes) for this chip."""
    cap = _vmem_capacity_bytes()
    if cap >= 96 * 1024 * 1024:
        # v5e / v6e: 128 MiB VMEM.  2 inputs x 2 buffers x 6 MiB = 24 MiB of
        # pipeline buffers, plus f32 block-sized intermediates, fits in 96 MiB.
        return 6 * 1024 * 1024, min(96 * 1024 * 1024, cap)
    # v7x: 64 MiB VMEM.  Keep blocks ~2 MiB (>=512-wide blocks already reach
    # ~85% of HBM roofline) and stay well under the physical budget.
    return 2 * 1024 * 1024, min(40 * 1024 * 1024, cap)


def _pick_tiles(B, N, block_elems, num_cores):
    """Choose (tb, tn) honoring the (8,128) constraint and the VMEM budget.

    B must already be a multiple of 8 (the wrapper pads it).
    """
    tb = B
    t = min(B, _MAX_TB) // 8 * 8
    while t >= 8:
        if B % t == 0:
            tb = t
            break
        t -= 8
    # Megacore: keep >= num_cores steps on the parallel batch axis, but only
    # on chips that actually have >1 TensorCore.
    while num_cores > 1 and B // tb < num_cores and tb % 16 == 0:
        tb //= 2
    # N tile: full rows when they fit the VMEM budget, otherwise tile N in
    # 128-lane multiples (the online-softmax accumulator handles the rest).
    if tb * N <= block_elems or N % 128 != 0:
        tn = N
        while tb * tn > block_elems and tb % 16 == 0:
            tb //= 2  # N not tileable: shrink tb instead
    else:
        tn = max(128, (block_elems // tb) // 128 * 128)
        while N % tn:
            tn -= 128
    return tb, tn


def _wpbce_kernel(pos_ref, neg_ref, probs_ref, out_ref,
                  m_acc, num_acc, den_acc, *, inv_temperature):
    k = pl.program_id(1)

    @pl.when(k == 0)
    def _init():
        m_acc[...] = jnp.full_like(m_acc, -jnp.inf)
        num_acc[...] = jnp.zeros_like(num_acc)
        den_acc[...] = jnp.zeros_like(den_acc)

    neg = neg_ref[...].astype(jnp.float32)       # (tb, tn)
    probs = probs_ref[...].astype(jnp.float32)   # (tb, tn)

    # Exact softmax logits (per-element log; the stabiliser is the true max).
    z = neg * inv_temperature - jnp.log(probs)                  # (tb, tn)
    m_new = jnp.maximum(m_acc[...],
                        jnp.max(z, axis=-1, keepdims=True))     # (tb, 1)
    rescale = jnp.exp(m_acc[...] - m_new)                       # 0 on step 0
    e = jnp.exp(z - m_new)                                      # (tb, tn), <= 1

    # softplus(neg) = max(neg, 0) + log1p(exp(-|neg|))   (stable)
    sp = jnp.maximum(neg, 0.0) + jnp.log1p(jnp.exp(-jnp.abs(neg)))

    # Online-softmax accumulation: weight matrix never materialised.
    num_acc[...] = rescale * num_acc[...] + jnp.sum(sp * e, axis=-1, keepdims=True)
    den_acc[...] = rescale * den_acc[...] + jnp.sum(e, axis=-1, keepdims=True)
    m_acc[...] = m_new

    @pl.when(k == pl.num_programs(1) - 1)
    def _finalize():
        pos = pos_ref[...].astype(jnp.float32)                  # (tb, 1)
        # logsigmoid(pos) = min(pos, 0) - log1p(exp(-|pos|))   (stable)
        logsig = jnp.minimum(pos, 0.0) - jnp.log1p(jnp.exp(-jnp.abs(pos)))
        # Exact division: only (tb, 1) elements, so it is free.
        out_ref[...] = -logsig + num_acc[...] / den_acc[...]


def weighted_prob_bce_loss(pos_score, neg_score, probs, temperature=1.0,
                           *, tb=None, tn=None):
    """pos_score: (B, 1) or (B,), neg_score: (B, N), probs: (B, N) -> (B,) f32."""
    B, N = neg_score.shape
    assert probs.shape == (B, N)
    pos_score = pos_score.reshape(B, 1)

    # Pad B to a multiple of 8 so tiles stay (8,128)-regular; padded rows use
    # probs=1 / scores=0 so every intermediate stays finite.
    B_pad = -(-B // 8) * 8
    if B_pad != B:
        pb = B_pad - B
        pos_score = jnp.pad(pos_score, ((0, pb), (0, 0)))
        neg_score = jnp.pad(neg_score, ((0, pb), (0, 0)))
        probs = jnp.pad(probs, ((0, pb), (0, 0)), constant_values=1.0)

    block_bytes, vmem_limit = _vmem_budget()
    itemsize = max(jnp.dtype(neg_score.dtype).itemsize,
                   jnp.dtype(probs.dtype).itemsize)
    block_elems = max(block_bytes // itemsize, 8 * 128)

    auto_tb, auto_tn = _pick_tiles(B_pad, N, block_elems, _cores_per_chip())
    tb = auto_tb if tb is None else tb
    tn = auto_tn if tn is None else tn
    assert B_pad % tb == 0 and N % tn == 0, (B_pad, N, tb, tn)

    kernel = functools.partial(_wpbce_kernel,
                               inv_temperature=1.0 / float(temperature))

    out = pl.pallas_call(
        kernel,
        out_shape=jax.ShapeDtypeStruct((B_pad, 1), jnp.float32),
        grid_spec=pltpu.PrefetchScalarGridSpec(
            num_scalar_prefetch=0,
            grid=(B_pad // tb, N // tn),
            in_specs=[
                pl.BlockSpec((tb, 1), lambda i, k: (i, 0)),    # pos_score
                pl.BlockSpec((tb, tn), lambda i, k: (i, k)),   # neg_score
                pl.BlockSpec((tb, tn), lambda i, k: (i, k)),   # probs
            ],
            out_specs=pl.BlockSpec((tb, 1), lambda i, k: (i, 0)),
            scratch_shapes=[pltpu.VMEM((tb, 1), jnp.float32)] * 3,  # m, num, den
        ),
        compiler_params=pltpu.CompilerParams(
            dimension_semantics=("parallel", "arbitrary"),
            vmem_limit_bytes=vmem_limit,
        ),
    )(pos_score, neg_score, probs)
    # Output writes are (tb, 1) column blocks (<1% of HBM traffic here), so
    # the simple column layout is kept for lowering robustness.
    return out[:B, 0]


def _reference(pos_score, neg_score, probs, temperature=1.0):
    weight = jax.nn.softmax(neg_score / temperature - jnp.log(probs), axis=-1)
    return -jax.nn.log_sigmoid(jnp.squeeze(pos_score)) + jnp.sum(
        jax.nn.softplus(neg_score) * weight, axis=-1)


if __name__ == "__main__":
    key = jax.random.PRNGKey(0)
    k1, k2, k3 = jax.random.split(key, 3)

    B, N = 16, 256            # batch, number of negative samples
    temperature = 0.7

    pos_score = jax.random.normal(k1, (B, 1), dtype=jnp.float32)
    neg_score = jax.random.normal(k2, (B, N), dtype=jnp.float32)
    # Sampling probabilities spanning several orders of magnitude, to exercise
    # the exact per-element stabiliser.
    probs = jnp.exp(jax.random.uniform(k3, (B, N), dtype=jnp.float32,
                                       minval=jnp.log(1e-6), maxval=0.0))

    ref = _reference(pos_score, neg_score, probs, temperature)

    # 1) f32, auto tiling (single N block): tight check.
    loss = jax.block_until_ready(
        weighted_prob_bce_loss(pos_score, neg_score, probs, temperature))
    assert loss.shape == (B,)
    assert jnp.allclose(loss, ref, rtol=1e-4, atol=1e-5), (loss, ref)

    # 2) f32, forced N tiling so the online-softmax accumulator runs over
    #    multiple grid steps; exact math, so the same tight tolerance holds.
    loss_tiled = jax.block_until_ready(
        weighted_prob_bce_loss(pos_score, neg_score, probs, temperature,
                               tb=8, tn=128))
    assert loss_tiled.shape == (B,)
    assert jnp.allclose(loss_tiled, ref, rtol=1e-4, atol=1e-5), (loss_tiled, ref)

    # 3) bf16 inputs at the call site (halves HBM traffic on v5e/v6e); the
    #    kernel upcasts to f32 internally, so compared against the reference
    #    evaluated on the same bf16-rounded inputs the result is still tight.
    pos_bf = pos_score.astype(jnp.bfloat16)
    neg_bf = neg_score.astype(jnp.bfloat16)
    probs_bf = probs.astype(jnp.bfloat16)
    ref_bf = _reference(pos_bf.astype(jnp.float32), neg_bf.astype(jnp.float32),
                        probs_bf.astype(jnp.float32), temperature)
    loss_bf = jax.block_until_ready(
        weighted_prob_bce_loss(pos_bf, neg_bf, probs_bf, temperature))
    assert loss_bf.shape == (B,)
    assert jnp.allclose(loss_bf, ref_bf, rtol=1e-3, atol=1e-4), (loss_bf, ref_bf)

    print("KERNEL_OK")
</pallas_src>

<mosaic_0001>
module attributes {stable_mosaic.version = 11 : i64} {
  func.func @_wpbce_kernel(%arg0: i32, %arg1: i32, %arg2: memref<16x1xf32, #tpu.memory_space<vmem>>, %arg3: memref<16x256xf32, #tpu.memory_space<vmem>>, %arg4: memref<16x256xf32, #tpu.memory_space<vmem>>, %arg5: memref<16x1xf32, #tpu.memory_space<vmem>>, %arg6: memref<16x1xf32, #tpu.memory_space<vmem>>, %arg7: memref<16x1xf32, #tpu.memory_space<vmem>>, %arg8: memref<16x1xf32, #tpu.memory_space<vmem>>) attributes {dimension_semantics = [#tpu.dimension_semantics<parallel>, #tpu.dimension_semantics<arbitrary>], iteration_bounds = array<i64: 1, 1>, scalar_prefetch = 0 : i64, scratch_operands = 3 : i64, tpu.core_type = #tpu.core_type<tc>, window_params = [{transform_indices = @transform_0, window_bounds = array<i64: 16, 1>}, {transform_indices = @transform_1, window_bounds = array<i64: 16, 256>}, {transform_indices = @transform_2, window_bounds = array<i64: 16, 256>}, {transform_indices = @transform_3, window_bounds = array<i64: 16, 1>}]} {
    %c0_i32 = arith.constant 0 : i32
    %0 = arith.cmpi eq, %arg1, %c0_i32 : i32
    %1 = arith.extui %0 : i1 to i32
    %c0_i32_0 = arith.constant 0 : i32
    %2 = arith.cmpi ne, %1, %c0_i32_0 : i32
    scf.if %2 {
      %cst_25 = arith.constant 0xFF800000 : f32
      %44 = vector.broadcast %cst_25 : f32 to vector<16x1xf32>
      %c0_26 = arith.constant 0 : index
      %c0_27 = arith.constant 0 : index
      %45 = vector.load %arg6[%c0_26, %c0_27] : memref<16x1xf32, #tpu.memory_space<vmem>>, vector<16x1xf32>
      tpu.vector_store %arg6[%c0_26, %c0_27], %44 {strides = array<i32>} : memref<16x1xf32, #tpu.memory_space<vmem>>, vector<16x1xf32>,
      %cst_28 = arith.constant 0.000000e+00 : f32
      %46 = vector.broadcast %cst_28 : f32 to vector<16x1xf32>
      %c0_29 = arith.constant 0 : index
      %c0_30 = arith.constant 0 : index
      %47 = vector.load %arg7[%c0_29, %c0_30] : memref<16x1xf32, #tpu.memory_space<vmem>>, vector<16x1xf32>
      tpu.vector_store %arg7[%c0_29, %c0_30], %46 {strides = array<i32>} : memref<16x1xf32, #tpu.memory_space<vmem>>, vector<16x1xf32>,
      %cst_31 = arith.constant 0.000000e+00 : f32
      %48 = vector.broadcast %cst_31 : f32 to vector<16x1xf32>
      %c0_32 = arith.constant 0 : index
      %c0_33 = arith.constant 0 : index
      %49 = vector.load %arg8[%c0_32, %c0_33] : memref<16x1xf32, #tpu.memory_space<vmem>>, vector<16x1xf32>
      tpu.vector_store %arg8[%c0_32, %c0_33], %48 {strides = array<i32>} : memref<16x1xf32, #tpu.memory_space<vmem>>, vector<16x1xf32>,
    } else {
    }
    %c0 = arith.constant 0 : index
    %c0_1 = arith.constant 0 : index
    %3 = vector.load %arg3[%c0, %c0_1] : memref<16x256xf32, #tpu.memory_space<vmem>>, vector<16x256xf32>
    %c0_2 = arith.constant 0 : index
    %c0_3 = arith.constant 0 : index
    %4 = vector.load %arg4[%c0_2, %c0_3] : memref<16x256xf32, #tpu.memory_space<vmem>>, vector<16x256xf32>
    %cst = arith.constant 1.42857146 : f32
    %5 = vector.broadcast %cst : f32 to vector<16x256xf32>
    %6 = arith.mulf %3, %5 : vector<16x256xf32>
    %7 = math.log %4 : vector<16x256xf32>
    %8 = arith.subf %6, %7 : vector<16x256xf32>
    %c0_4 = arith.constant 0 : index
    %c0_5 = arith.constant 0 : index
    %9 = vector.load %arg6[%c0_4, %c0_5] : memref<16x1xf32, #tpu.memory_space<vmem>>, vector<16x1xf32>
    %cst_6 = arith.constant dense<0xFF800000> : vector<16xf32>
    %10 = vector.multi_reduction <maximumf>, %8, %cst_6 [1] : vector<16x256xf32> to vector<16xf32>
    %11 = vector.shape_cast %10 : vector<16xf32> to vector<16x1xf32>
    %12 = arith.maximumf %9, %11 : vector<16x1xf32>
    %c0_7 = arith.constant 0 : index
    %c0_8 = arith.constant 0 : index
    %13 = vector.load %arg6[%c0_7, %c0_8] : memref<16x1xf32, #tpu.memory_space<vmem>>, vector<16x1xf32>
    %14 = arith.subf %13, %12 : vector<16x1xf32>
    %15 = math.exp %14 : vector<16x1xf32>
    %16 = vector.broadcast %12 : vector<16x1xf32> to vector<16x256xf32>
    %17 = arith.subf %8, %16 : vector<16x256xf32>
    %18 = math.exp %17 : vector<16x256xf32>
    %cst_9 = arith.constant 0.000000e+00 : f32
    %19 = vector.broadcast %cst_9 : f32 to vector<16x256xf32>
    %20 = arith.maximumf %3, %19 : vector<16x256xf32>
    %21 = math.absf %3 : vector<16x256xf32>
    %cst_10 = arith.constant 0.000000e+00 : f32
    %22 = vector.broadcast %cst_10 : f32 to vector<16x256xf32>
    %23 = arith.subf %22, %21 : vector<16x256xf32>
    %24 = math.exp %23 : vector<16x256xf32>
    %25 = math.log1p %24 : vector<16x256xf32>
    %26 = arith.addf %20, %25 : vector<16x256xf32>
    %c0_11 = arith.constant 0 : index
    %c0_12 = arith.constant 0 : index
    %27 = vector.load %arg7[%c0_11, %c0_12] : memref<16x1xf32, #tpu.memory_space<vmem>>, vector<16x1xf32>
    %28 = arith.mulf %15, %27 : vector<16x1xf32>
    %29 = arith.mulf %26, %18 : vector<16x256xf32>
    %cst_13 = arith.constant dense<0.000000e+00> : vector<16xf32>
    %30 = vector.multi_reduction <add>, %29, %cst_13 [1] : vector<16x256xf32> to vector<16xf32>
    %31 = vector.shape_cast %30 : vector<16xf32> to vector<16x1xf32>
    %32 = arith.addf %28, %31 : vector<16x1xf32>
    %c0_14 = arith.constant 0 : index
    %c0_15 = arith.constant 0 : index
    %33 = vector.load %arg7[%c0_14, %c0_15] : memref<16x1xf32, #tpu.memory_space<vmem>>, vector<16x1xf32>
    tpu.vector_store %arg7[%c0_14, %c0_15], %32 {strides = array<i32>} : memref<16x1xf32, #tpu.memory_space<vmem>>, vector<16x1xf32>,
    %c0_16 = arith.constant 0 : index
    %c0_17 = arith.constant 0 : index
    %34 = vector.load %arg8[%c0_16, %c0_17] : memref<16x1xf32, #tpu.memory_space<vmem>>, vector<16x1xf32>
    %35 = arith.mulf %15, %34 : vector<16x1xf32>
    %cst_18 = arith.constant dense<0.000000e+00> : vector<16xf32>
    %36 = vector.multi_reduction <add>, %18, %cst_18 [1] : vector<16x256xf32> to vector<16xf32>
    %37 = vector.shape_cast %36 : vector<16xf32> to vector<16x1xf32>
    %38 = arith.addf %35, %37 : vector<16x1xf32>
    %c0_19 = arith.constant 0 : index
    %c0_20 = arith.constant 0 : index
    %39 = vector.load %arg8[%c0_19, %c0_20] : memref<16x1xf32, #tpu.memory_space<vmem>>, vector<16x1xf32>
    tpu.vector_store %arg8[%c0_19, %c0_20], %38 {strides = array<i32>} : memref<16x1xf32, #tpu.memory_space<vmem>>, vector<16x1xf32>,
    %c0_21 = arith.constant 0 : index
    %c0_22 = arith.constant 0 : index
    %40 = vector.load %arg6[%c0_21, %c0_22] : memref<16x1xf32, #tpu.memory_space<vmem>>, vector<16x1xf32>
    tpu.vector_store %arg6[%c0_21, %c0_22], %12 {strides = array<i32>} : memref<16x1xf32, #tpu.memory_space<vmem>>, vector<16x1xf32>,
    %c0_i32_23 = arith.constant 0 : i32
    %41 = arith.cmpi eq, %arg1, %c0_i32_23 : i32
    %42 = arith.extui %41 : i1 to i32
    %c0_i32_24 = arith.constant 0 : i32
    %43 = arith.cmpi ne, %42, %c0_i32_24 : i32
    scf.if %43 {
      %c0_25 = arith.constant 0 : index
      %c0_26 = arith.constant 0 : index
      %44 = vector.load %arg2[%c0_25, %c0_26] : memref<16x1xf32, #tpu.memory_space<vmem>>, vector<16x1xf32>
      %cst_27 = arith.constant 0.000000e+00 : f32
      %45 = vector.broadcast %cst_27 : f32 to vector<16x1xf32>
      %46 = arith.minimumf %44, %45 : vector<16x1xf32>
      %47 = math.absf %44 : vector<16x1xf32>
      %cst_28 = arith.constant 0.000000e+00 : f32
      %48 = vector.broadcast %cst_28 : f32 to vector<16x1xf32>
      %49 = arith.subf %48, %47 : vector<16x1xf32>
      %50 = math.exp %49 : vector<16x1xf32>
      %51 = math.log1p %50 : vector<16x1xf32>
      %52 = arith.subf %46, %51 : vector<16x1xf32>
      %cst_29 = arith.constant 0.000000e+00 : f32
      %53 = vector.broadcast %cst_29 : f32 to vector<16x1xf32>
      %54 = arith.subf %53, %52 : vector<16x1xf32>
      %c0_30 = arith.constant 0 : index
      %c0_31 = arith.constant 0 : index
      %55 = vector.load %arg7[%c0_30, %c0_31] : memref<16x1xf32, #tpu.memory_space<vmem>>, vector<16x1xf32>
      %c0_32 = arith.constant 0 : index
      %c0_33 = arith.constant 0 : index
      %56 = vector.load %arg8[%c0_32, %c0_33] : memref<16x1xf32, #tpu.memory_space<vmem>>, vector<16x1xf32>
      %57 = arith.divf %55, %56 : vector<16x1xf32>
      %58 = arith.addf %54, %57 : vector<16x1xf32>
      %c0_34 = arith.constant 0 : index
      %c0_35 = arith.constant 0 : index
      %59 = vector.load %arg5[%c0_34, %c0_35] : memref<16x1xf32, #tpu.memory_space<vmem>>, vector<16x1xf32>
      tpu.vector_store %arg5[%c0_34, %c0_35], %58 {strides = array<i32>} : memref<16x1xf32, #tpu.memory_space<vmem>>, vector<16x1xf32>,
    } else {
    }
    return
  }
  func.func @transform_0(%arg0: i32, %arg1: i32) -> (i32, i32) {
    %c0_i32 = arith.constant 0 : i32
    %c0_i32_0 = arith.constant 0 : i32
    return %arg0, %c0_i32 : i32, i32
  }
  func.func @transform_1(%arg0: i32, %arg1: i32) -> (i32, i32) {
    %c0_i32 = arith.constant 0 : i32
    return %arg0, %arg1 : i32, i32
  }
  func.func @transform_2(%arg0: i32, %arg1: i32) -> (i32, i32) {
    %c0_i32 = arith.constant 0 : i32
    return %arg0, %arg1 : i32, i32
  }
  func.func @transform_3(%arg0: i32, %arg1: i32) -> (i32, i32) {
    %c0_i32 = arith.constant 0 : i32
    %c0_i32_0 = arith.constant 0 : i32
    return %arg0, %c0_i32 : i32, i32
  }
}

</mosaic_0001>

<llo_original>
// kernel: tpu_custom_call.1
$region0: #{tpu_custom_call.1}
  #allocation0 [shape = 'u32[]', space=smem, size = 0x4, offset = 0x4, fixed_abs, tag = 'smem constant byte address 0x4 - core index']
  #allocation1 [shape = 'u32[72,128]{1,0:T(1,128)}', space=vmem, size = 0x9000, scoped, tag = 'internal scratch']
  #allocation2 [shape = 'f32[16,1]{1,0:T(8,128)}', space=vmem, size = 0x2000, scoped, tag = 'scratch operand']
  #allocation3 [shape = 'f32[16,1]{1,0:T(8,128)}', space=vmem, size = 0x2000, scoped, tag = 'scratch operand']
  #allocation4 [shape = 'f32[16,1]{1,0:T(8,128)}', space=vmem, size = 0x2000, scoped, tag = 'scratch operand']
  %s0 = inlined_call_operand.vmem [shape: f32[16,1], index: 0, kind: input, shape index: {}]
  %s1 = inlined_call_operand.hbm [shape: f32[16,256], index: 1, kind: input, shape index: {}]
  %s2 = inlined_call_operand.hbm [shape: f32[16,256], index: 2, kind: input, shape index: {}]
  %s3 = inlined_call_operand.vmem [shape: f32[16,1], index: 3, kind: output, shape index: {}]
  %s4 = sld [smem:[#allocation0]]
  $region38: #{tpu_custom_call.1} parent=0
    _
  %s6 = ssub.s32 1, %s4
  %s7 = scalar_select 0, %s6, %s4
  $region1: #{tpu_custom_call.1} parent=0
    #allocation5 [shape = 'u8[16384]{0}', space=vmem, size = 0x4000, scoped, tag = 'input window, operand 1, single buffered']
    #allocation6 [shape = 's32[1]{0}', space=sflag, size = 0x4, scoped, tag = 'scoped memory for tpu_custom_call.1']
    #allocation7 [shape = 'u8[16384]{0}', space=vmem, size = 0x4000, scoped, tag = 'input window, operand 2, single buffered']
    #allocation8 [shape = 's32[1]{0}', space=sflag, size = 0x4, scoped, tag = 'scoped memory for tpu_custom_call.1']
    %8 = vsyncpa [#allocation6], 0
    %9 = vsyncpa [#allocation8], 0
    // Predicated region
    $region2: #{tpu_custom_call.1} parent=1 // pred_check
      _
    $region3: #{tpu_custom_call.1} parent=1 // pred_check_branch
      %11 = sbr.rel (0) target = $region5
    $region4: #{tpu_custom_call.1} parent=1 // pred_region
      _
    $region5: #{tpu_custom_call.1} parent=1 // pred_fallthru
      _
    // Predicated region
    $region6: #{tpu_custom_call.1} parent=1 // pred_check
      _
    $region7: #{tpu_custom_call.1} parent=1 // pred_check_branch
      %13 = sbr.rel (0) target = $region9
    $region8: #{tpu_custom_call.1} parent=1 // pred_region
      %15 = vsyncadd [#allocation6], 0
      %s16 = sshll.u32 %s1, 4
      %s17 = int_to_ptr.hbm [resolvable:$true] %s16
      %s18 = sshll.u32 [#allocation5], 4
      %s19 = int_to_ptr.vmem [resolvable:$true] %s18
      %24 = dma.hbm_to_vmem [thread:$0]  %s17, 512, %s19, [#allocation6], 256, 256, 16
    $region9: #{tpu_custom_call.1} parent=1 // pred_fallthru
      _
    // Predicated region
    $region10: #{tpu_custom_call.1} parent=1 // pred_check
      _
    $region11: #{tpu_custom_call.1} parent=1 // pred_check_branch
      %26 = sbr.rel (0) target = $region13
    $region12: #{tpu_custom_call.1} parent=1 // pred_region
      %28 = vsyncadd [#allocation8], 0
      %s29 = sshll.u32 %s2, 4
      %s30 = int_to_ptr.hbm [resolvable:$true] %s29
      %s31 = sshll.u32 [#allocation7], 4
      %s32 = int_to_ptr.vmem [resolvable:$true] %s31
      %37 = dma.hbm_to_vmem [thread:$0]  %s30, 512, %s32, [#allocation8], 256, 256, 16
    $region13: #{tpu_custom_call.1} parent=1 // pred_fallthru
      _
    // Predicated region
    $region14: #{tpu_custom_call.1} parent=1 // pred_check
      _
    $region15: #{tpu_custom_call.1} parent=1 // pred_check_branch
      %39 = sbr.rel (0) target = $region17
    $region16: #{tpu_custom_call.1} parent=1 // pred_region
      %41 = dma.done [#allocation6], 512
    $region17: #{tpu_custom_call.1} parent=1 // pred_fallthru
      _
    // Predicated region
    $region18: #{tpu_custom_call.1} parent=1 // pred_check
      _
    $region19: #{tpu_custom_call.1} parent=1 // pred_check_branch
      %43 = sbr.rel (0) target = $region21
    $region20: #{tpu_custom_call.1} parent=1 // pred_region
      %45 = dma.done [#allocation8], 512
    $region21: #{tpu_custom_call.1} parent=1 // pred_fallthru
      _
    %p46 = scmp.eq.s32.totalorder 0, 0
    // Predicated region
    $region22: #{tpu_custom_call.1} parent=1 // pred_check
      %p47 = pneg %p46
    $region23: #{tpu_custom_call.1} parent=1 // pred_check_branch
      %49 = sbr.rel (%p47) target = $region25
    $region24: #{tpu_custom_call.1} parent=1 // pred_region
      %vm50 = vcmask 7168
      %51 = vst.msk [vmem:[#allocation2] sm:$0xff] %vm50, -inf
      %52 = vst.msk [vmem:[#allocation2 + $0x8] sm:$0xff] %vm50, -inf
      %53 = vst.msk [vmem:[#allocation3] sm:$0xff] %vm50, 0.0
      %54 = vst.msk [vmem:[#allocation3 + $0x8] sm:$0xff] %vm50, 0.0
      %55 = vst.msk [vmem:[#allocation4] sm:$0xff] %vm50, 0.0
      %56 = vst.msk [vmem:[#allocation4 + $0x8] sm:$0xff] %vm50, 0.0
    $region25: #{tpu_custom_call.1} parent=1 // pred_fallthru
      _
    %v57 = vld [vmem:[#allocation5] sm:$0xff]
    %v58 = vld [vmem:[#allocation5 + $0x8] sm:$0xff]
    %v59 = vld [vmem:[#allocation5 + $0x10] sm:$0xff]
    %v60 = vld [vmem:[#allocation5 + $0x18] sm:$0xff]
    %v61 = vld [vmem:[#allocation7] sm:$0xff]
    %v62 = vld [vmem:[#allocation7 + $0x8] sm:$0xff]
    %v63 = vld [vmem:[#allocation7 + $0x10] sm:$0xff]
    %v64 = vld [vmem:[#allocation7 + $0x18] sm:$0xff]
    %v65 = vmul.f32 %v57, 1.4285715
    %v66 = vmul.f32 %v58, 1.4285715
    %v67 = vmul.f32 %v59, 1.4285715
    %v68 = vmul.f32 %v60, 1.4285715
    %v69 = vlog2.pop %v61
    %v70 = vmul.f32 %v69, 0.6931472
    %v71 = vlog2.pop %v62
    %v72 = vmul.f32 %v71, 0.6931472
    %v73 = vlog2.pop %v63
    %v74 = vmul.f32 %v73, 0.6931472
    %v75 = vlog2.pop %v64
    %v76 = vmul.f32 %v75, 0.6931472
    %v77 = vsub.f32 %v65, %v70
    %v78 = vsub.f32 %v66, %v72
    %v79 = vsub.f32 %v67, %v74
    %v80 = vsub.f32 %v68, %v76
    %v81 = vld [vmem:[#allocation2] sm:$0xff]
    %v82 = vld [vmem:[#allocation2 + $0x8] sm:$0xff]
    %v83 = vmax.f32 %v77, %v78
    %84 = vmax.xlane.f32.xlu0 %v83
    %v85 = vpop.xlane.xlu0 %84
    %v86 = vmax.f32 %v79, %v80
    %87 = vmax.xlane.f32.xlu0 %v86
    %v88 = vpop.xlane.xlu0 %87
    %v89 = vmax.f32 %v81, %v85
    %v90 = vmax.f32 %v82, %v88
    %v91 = vsub.f32 %v81, %v89
    %v92 = vsub.f32 %v82, %v90
    %v93 = vmul.f32 %v91, 1.442695
    %v94 = vpow.pop %v93
    %v95 = vmul.f32 %v92, 1.442695
    %v96 = vpow.pop %v95
    %98 = vset.pattern.permute.xlu0 0
    %99 = vperm.xlu0 %98, %v89
    %v100 = vpop.permute.xlu0 %99
    %103 = vset.pattern.permute.xlu0 0
    %104 = vperm.xlu0 %103, %v90
    %v105 = vpop.permute.xlu0 %104
    %v107 = vsub.f32 %v77, %v100
    %v108 = vsub.f32 %v78, %v100
    %v109 = vsub.f32 %v79, %v105
    %v110 = vsub.f32 %v80, %v105
    %v111 = vmul.f32 %v107, 1.442695
    %v112 = vpow.pop %v111
    %v113 = vmul.f32 %v108, 1.442695
    %v114 = vpow.pop %v113
    %v115 = vmul.f32 %v109, 1.442695
    %v116 = vpow.pop %v115
    %v117 = vmul.f32 %v110, 1.442695
    %v118 = vpow.pop %v117
    %v119 = vmax.f32 %v57, 0.0
    %v120 = vmax.f32 %v58, 0.0
    %v121 = vmax.f32 %v59, 0.0
    %v122 = vmax.f32 %v60, 0.0
    %v123 = vand.u32 2147483647, %v57
    %v124 = vand.u32 2147483647, %v58
    %v125 = vand.u32 2147483647, %v59
    %v126 = vand.u32 2147483647, %v60
    %v127 = vsub.f32 0.0, %v123
    %v128 = vsub.f32 0.0, %v124
    %v129 = vsub.f32 0.0, %v125
    %v130 = vsub.f32 0.0, %v126
    %v131 = vmul.f32 %v127, 1.442695
    %v132 = vpow.pop %v131
    %v133 = vmul.f32 %v128, 1.442695
    %v134 = vpow.pop %v133
    %v135 = vmul.f32 %v129, 1.442695
    %v136 = vpow.pop %v135
    %v137 = vmul.f32 %v130, 1.442695
    %v138 = vpow.pop %v137
    %v139 = vadd.f32 %v132, 1.0
    %v140 = vlog2.pop %v139
    %v141 = vmul.f32 %v140, 0.6931472
    %v142 = vmul.f32 -0.5, %v132
    %v143 = vadd.f32 %v142, 1.0
    %v144 = vmul.f32 %v143, %v132
    %v145 = vand.u32 2147483647, %v132
    %vm146 = vcmp.lt.f32.partialorder %v145, 0.0004427343
    %v147 = vsel %vm146, %v144, %v141
    %v148 = vadd.f32 %v134, 1.0
    %v149 = vlog2.pop %v148
    %v150 = vmul.f32 %v149, 0.6931472
    %v151 = vmul.f32 -0.5, %v134
    %v152 = vadd.f32 %v151, 1.0
    %v153 = vmul.f32 %v152, %v134
    %v154 = vand.u32 2147483647, %v134
    %vm155 = vcmp.lt.f32.partialorder %v154, 0.0004427343
    %v156 = vsel %vm155, %v153, %v150
    %v157 = vadd.f32 %v136, 1.0
    %v158 = vlog2.pop %v157
    %v159 = vmul.f32 %v158, 0.6931472
    %v160 = vmul.f32 -0.5, %v136
    %v161 = vadd.f32 %v160, 1.0
    %v162 = vmul.f32 %v161, %v136
    %v163 = vand.u32 2147483647, %v136
    %vm164 = vcmp.lt.f32.partialorder %v163, 0.0004427343
    %v165 = vsel %vm164, %v162, %v159
    %v166 = vadd.f32 %v138, 1.0
    %v167 = vlog2.pop %v166
    %v168 = vmul.f32 %v167, 0.6931472
    %v169 = vmul.f32 -0.5, %v138
    %v170 = vadd.f32 %v169, 1.0
    %v171 = vmul.f32 %v170, %v138
    %v172 = vand.u32 2147483647, %v138
    %vm173 = vcmp.lt.f32.partialorder %v172, 0.0004427343
    %v174 = vsel %vm173, %v171, %v168
    %v175 = vadd.f32 %v119, %v147
    %v176 = vadd.f32 %v120, %v156
    %v177 = vadd.f32 %v121, %v165
    %v178 = vadd.f32 %v122, %v174
    %v179 = vld [vmem:[#allocation3] sm:$0xff]
    %v180 = vld [vmem:[#allocation3 + $0x8] sm:$0xff]
    %v181 = vmul.f32 %v94, %v179
    %v182 = vmul.f32 %v96, %v180
    %v183 = vmul.f32 %v175, %v112
    %v184 = vmul.f32 %v176, %v114
    %v185 = vmul.f32 %v177, %v116
    %v186 = vmul.f32 %v178, %v118
    %v187 = vadd.f32 %v183, %v184
    %188 = vadd.xlane.f32.xlu0 %v187
    %v189 = vpop.xlane.xlu0 %188
    %v190 = vadd.f32 %v185, %v186
    %191 = vadd.xlane.f32.xlu0 %v190
    %v192 = vpop.xlane.xlu0 %191
    %v193 = vadd.f32 %v181, %v189
    %v194 = vadd.f32 %v182, %v192
    %vm195 = vcmask 7168
    %196 = vst.msk [vmem:[#allocation3] sm:$0xff] %vm195, %v193
    %197 = vst.msk [vmem:[#allocation3 + $0x8] sm:$0xff] %vm195, %v194
    %v198 = vld [vmem:[#allocation4] sm:$0xff]
    %v199 = vld [vmem:[#allocation4 + $0x8] sm:$0xff]
    %v200 = vmul.f32 %v94, %v198
    %v201 = vmul.f32 %v96, %v199
    %v202 = vadd.f32 %v112, %v114
    %203 = vadd.xlane.f32.xlu0 %v202
    %v204 = vpop.xlane.xlu0 %203
    %v205 = vadd.f32 %v116, %v118
    %206 = vadd.xlane.f32.xlu0 %v205
    %v207 = vpop.xlane.xlu0 %206
    %v208 = vadd.f32 %v200, %v204
    %v209 = vadd.f32 %v201, %v207
    %210 = vst.msk [vmem:[#allocation4] sm:$0xff] %vm195, %v208
    %211 = vst.msk [vmem:[#allocation4 + $0x8] sm:$0xff] %vm195, %v209
    %212 = vst.msk [vmem:[#allocation2] sm:$0xff] %vm195, %v89
    %213 = vst.msk [vmem:[#allocation2 + $0x8] sm:$0xff] %vm195, %v90
    // Predicated region
    $region26: #{tpu_custom_call.1} parent=1 // pred_check
      %p214 = pneg %p46
    $region27: #{tpu_custom_call.1} parent=1 // pred_check_branch
      %216 = sbr.rel (%p214) target = $region29
    $region28: #{tpu_custom_call.1} parent=1 // pred_region
      %v217 = vld [vmem:[%s0] sm:$0xff]
      %v218 = vld [vmem:[%s0 + $0x8] sm:$0xff]
      %v219 = vmin.f32 %v217, 0.0
      %v220 = vmin.f32 %v218, 0.0
      %v221 = vand.u32 2147483647, %v217
      %v222 = vand.u32 2147483647, %v218
      %v223 = vsub.f32 0.0, %v221
      %v224 = vsub.f32 0.0, %v222
      %v225 = vmul.f32 %v223, 1.442695
      %v226 = vpow.pop %v225
      %v227 = vmul.f32 %v224, 1.442695
      %v228 = vpow.pop %v227
      %v229 = vadd.f32 %v226, 1.0
      %v230 = vlog2.pop %v229
      %v231 = vmul.f32 %v230, 0.6931472
      %v232 = vmul.f32 -0.5, %v226
      %v233 = vadd.f32 %v232, 1.0
      %v234 = vmul.f32 %v233, %v226
      %v235 = vand.u32 2147483647, %v226
      %vm236 = vcmp.lt.f32.partialorder %v235, 0.0004427343
      %v237 = vsel %vm236, %v234, %v231
      %v238 = vadd.f32 %v228, 1.0
      %v239 = vlog2.pop %v238
      %v240 = vmul.f32 %v239, 0.6931472
      %v241 = vmul.f32 -0.5, %v228
      %v242 = vadd.f32 %v241, 1.0
      %v243 = vmul.f32 %v242, %v228
      %v244 = vand.u32 2147483647, %v228
      %vm245 = vcmp.lt.f32.partialorder %v244, 0.0004427343
      %v246 = vsel %vm245, %v243, %v240
      %v247 = vsub.f32 %v219, %v237
      %v248 = vsub.f32 %v220, %v246
      %v249 = vsub.f32 0.0, %v247
      %v250 = vsub.f32 0.0, %v248
      %v251 = vld [vmem:[#allocation3] sm:$0xff]
      %v252 = vld [vmem:[#allocation3 + $0x8] sm:$0xff]
      %v253 = vld [vmem:[#allocation4] sm:$0xff]
      %v254 = vld [vmem:[#allocation4 + $0x8] sm:$0xff]
      %v255 = vrcp.pop %v253
      %v256 = vmul.f32 %v253, %v255
      %v257 = vsub.f32 1.0, %v256
      %v258 = vmul.f32 %v255, %v257
      %v259 = vadd.f32 %v255, %v258
      %vm260 = vweird.f32 %v253
      %vm261 = vweird.f32 %v255
      %vm262 = vmor %vm260, %vm261
      %v263 = vsel %vm262, %v255, %v259
      %v264 = vand.u32 2147483647, %v253
      %vm265 = vcmp.eq.f32.partialorder %v264, 8.507059e+37
      %v266 = vand.u32 %v253, 2147483648
      %v267 = vor.u32 1.1754944e-38, %v266
      %v268 = vsel %vm265, %v267, %v263
      %v269 = vmul.f32 %v251, %v268
      %v270 = vrcp.pop %v254
      %v271 = vmul.f32 %v254, %v270
      %v272 = vsub.f32 1.0, %v271
      %v273 = vmul.f32 %v270, %v272
      %v274 = vadd.f32 %v270, %v273
      %vm275 = vweird.f32 %v254
      %vm276 = vweird.f32 %v270
      %vm277 = vmor %vm275, %vm276
      %v278 = vsel %vm277, %v270, %v274
      %v279 = vand.u32 2147483647, %v254
      %vm280 = vcmp.eq.f32.partialorder %v279, 8.507059e+37
      %v281 = vand.u32 %v254, 2147483648
      %v282 = vor.u32 1.1754944e-38, %v281
      %v283 = vsel %vm280, %v282, %v278
      %v284 = vmul.f32 %v252, %v283
      %v285 = vadd.f32 %v249, %v269
      %v286 = vadd.f32 %v250, %v284
      %287 = vst.msk [vmem:[%s3] sm:$0xff] %vm195, %v285
      %288 = vst.msk [vmem:[%s3 + $0x8] sm:$0xff] %vm195, %v286
    $region29: #{tpu_custom_call.1} parent=1 // pred_fallthru
      _
    // Predicated region
    $region30: #{tpu_custom_call.1} parent=1 // pred_check
      _
    $region31: #{tpu_custom_call.1} parent=1 // pred_check_branch
      %290 = sbr.rel (0) target = $region33
    $region32: #{tpu_custom_call.1} parent=1 // pred_region
      _
    $region33: #{tpu_custom_call.1} parent=1 // pred_fallthru
      _
    // Predicated region
    $region34: #{tpu_custom_call.1} parent=1 // pred_check
      _
    $region35: #{tpu_custom_call.1} parent=1 // pred_check_branch
      %292 = sbr.rel (0) target = $region37
    $region36: #{tpu_custom_call.1} parent=1 // pred_region
      _
    $region37: #{tpu_custom_call.1} parent=1 // pred_fallthru
      _
    %293 = vsyncpa [#allocation6], 1
    %294 = vsyncpa [#allocation8], 1

</llo_original>
